<compile_context>
chip_gen: v7x
topology: tpu7x:2x2x1
jax: 0.10.0
libtpu: 0.0.40
codegen_flags: <defaults>
</compile_context>

<pallas_src>
import functools

import jax
import jax.numpy as jnp
from jax.experimental import pallas as pl
from jax.experimental.pallas import tpu as pltpu


def _focal_loss_kernel(x_ref, t_ref, a_ref, out_ref, *,
                       gamma, n_valid, tn, chunk, masked):
    j = pl.program_id(0)

    # Hoisted out of the chunk loop (JAX does not CSE broadcast_in_dim).
    alpha = a_ref[...].astype(jnp.float32)                       # (C, 1)
    lane = jax.lax.broadcasted_iota(jnp.int32, (1, chunk), 1)    # (1, chunk)
    num_chunks = tn // chunk

    def body(c, acc):
        start = pl.multiple_of(c * chunk, 128)
        x = x_ref[:, pl.ds(start, chunk)].astype(jnp.float32)    # (C, chunk)
        t = t_ref[:, pl.ds(start, chunk)]                        # (1, chunk) int32

        # Softmax statistics over the class axis (axis 0) without materializing
        # a full log_softmax: only z plus two (1, chunk) row vectors are live.
        m = jnp.max(x, axis=0, keepdims=True)                    # (1, chunk)
        z = x - m                                                # (C, chunk)
        lse = jnp.log(jnp.sum(jnp.exp(z), axis=0, keepdims=True))

        # One-hot gather of the target class (no dynamic gather on TPU).
        cls = jax.lax.broadcasted_iota(jnp.int32, z.shape, 0)
        onehot = cls == t
        # jnp.where (not sel*z) keeps -inf logits in non-target classes safe.
        z_t = jnp.sum(jnp.where(onehot, z, 0.0), axis=0, keepdims=True)
        at = jnp.sum(jnp.where(onehot, alpha, 0.0), axis=0, keepdims=True)

        logpt = z_t - lse                                        # (1, chunk)
        pt = jnp.exp(logpt)
        logpt_w = logpt * at

        if gamma == 0:
            loss = -logpt_w
        else:
            one_m_pt = jnp.maximum(1.0 - pt, 0.0)     # clamp: pt can round past 1
            if float(gamma).is_integer() and gamma > 0:
                g = int(gamma)                        # square-and-multiply on VPU
                mod = None
                base = one_m_pt
                while g:
                    if g & 1:
                        mod = base if mod is None else mod * base
                    g >>= 1
                    if g:
                        base = base * base
            else:
                mod = one_m_pt ** jnp.float32(gamma)  # generic pow (fractional)
            loss = -mod * logpt_w

        if masked:
            # The last tile's DMA is clipped to the array; tail lanes hold
            # stale/garbage data, so zero their contribution here.
            valid = (j * tn + start) + lane < n_valid
            loss = jnp.where(valid, loss, 0.0)

        # Fold the (1, chunk) loss to a lane-dense (1, 128) partial with
        # vreg-aligned static slices (pure VPU adds; no cross-lane reduce).
        partial = loss[:, 0:128]
        for k in range(1, chunk // 128):
            partial = partial + loss[:, k * 128:(k + 1) * 128]
        return acc + partial

    acc = jax.lax.fori_loop(0, num_chunks, body,
                            jnp.zeros((1, 128), jnp.float32),
                            unroll=num_chunks <= 8)
    out_ref[...] = acc


def focal_loss(x, target, alpha=None, *, gamma=0.0, size_average=False,
               tn=None, input_cast_dtype=None):
    """x: [C, N] float (f32 or bf16), target: [N] int, alpha: [C] float or None.

    `tn` (optional, multiple of 128) is an upper bound on the lane tile.
    `input_cast_dtype` optionally casts x (e.g. to bf16) in the wrapper to
    halve HBM bytes on low-bandwidth chips; the kernel computes in f32.
    """
    C, N = x.shape

    if input_cast_dtype is not None:
        x = x.astype(input_cast_dtype)

    if alpha is None:
        alpha = jnp.ones((C,), jnp.float32)

    x_itemsize = jnp.dtype(x.dtype).itemsize

    # ---- Generation-aware VMEM budget ---------------------------------------
    try:
        vmem_cap = int(pltpu.get_tpu_info().vmem_capacity_bytes)
    except Exception:
        vmem_cap = 64 << 20                   # conservative (v7x-sized) fallback
    x_budget = vmem_cap // 4                  # for the double-buffered logits tiles
    per_buf_cap = x_budget // 2

    if 2 * C * 128 * x_itemsize > x_budget:
        # TODO(synk): vocab-scale C needs a class-axis grid dimension with an
        # online-softmax (running max / sumexp / z_t / at) accumulator.
        raise NotImplementedError(
            "focal_loss: class axis too large to keep resident in VMEM")

    def _rdown128(v):
        return max(128, (v // 128) * 128)

    def _rup128(v):
        return ((v + 127) // 128) * 128

    # ---- Tile sizing by bytes (kernel is HBM-bound) --------------------------
    target_tile_bytes = 2 << 20               # ~2 MiB logits per pipeline buffer
    tn_eff = _rdown128(target_tile_bytes // (C * x_itemsize))
    tn_eff = min(tn_eff, _rdown128(per_buf_cap // (C * x_itemsize)))
    tn_eff = min(tn_eff, _rup128(N))
    # Keep >= 2 tiles so the "parallel" axis can shard across v7x's 2 TCs.
    tn_eff = min(tn_eff, _rup128((N + 1) // 2))
    if tn is not None:
        assert tn > 0 and tn % 128 == 0
        tn_eff = min(tn_eff, tn)

    # In-kernel chunk loop bounds vreg / VMEM-temporary pressure while keeping
    # the per-grid-step DMA large.
    chunk = max(128, min(512, ((64 * 1024) // (C * 4)) // 128 * 128))
    chunk = min(chunk, tn_eff)
    tn_eff = max(chunk, (tn_eff // chunk) * chunk)

    num_tiles = pl.cdiv(N, tn_eff)
    masked = num_tiles * tn_eff != N          # last block overruns the array

    # No padded HBM copy of x (or target): the last block's DMA is clipped and
    # the kernel masks the tail lanes.
    t2d = target.astype(jnp.int32).reshape(1, N)
    a2d = jnp.asarray(alpha, jnp.float32).reshape(C, 1)

    # Tell the compiler how much VMEM we actually want (scoped defaults are
    # below the useful budget on v5e/v6e).
    vmem_need = (2 * C * tn_eff * x_itemsize      # double-buffered logits
                 + 2 * tn_eff * 4                 # double-buffered targets
                 + 2 * C * 4 + 2 * 128 * 4        # alpha + output blocks
                 + 12 * C * chunk * 4)            # in-kernel f32 temporaries
    vmem_limit = max(vmem_need + (8 << 20), 32 << 20)
    vmem_limit = min(vmem_limit, max(vmem_cap - (8 << 20), 16 << 20))

    kernel = functools.partial(
        _focal_loss_kernel, gamma=gamma, n_valid=N, tn=tn_eff, chunk=chunk,
        masked=masked)

    partials = pl.pallas_call(
        kernel,
        out_shape=jax.ShapeDtypeStruct((1, num_tiles * 128), jnp.float32),
        grid_spec=pltpu.PrefetchScalarGridSpec(
            num_scalar_prefetch=0,
            grid=(num_tiles,),
            in_specs=[
                pl.BlockSpec((C, tn_eff), lambda j: (0, j)),   # logits tile
                pl.BlockSpec((1, tn_eff), lambda j: (0, j)),   # targets tile
                pl.BlockSpec((C, 1), lambda j: (0, 0)),        # alpha (resident)
            ],
            out_specs=pl.BlockSpec((1, 128), lambda j: (0, j)),  # per-tile partial
        ),
        compiler_params=pltpu.CompilerParams(
            dimension_semantics=("parallel",),     # tiles are independent
            vmem_limit_bytes=int(vmem_limit),
        ),
    )(x, t2d, a2d)

    total = jnp.sum(partials)                      # single final reduce in JAX
    if size_average:
        return total / jnp.float32(N)
    return total


def _focal_loss_ref(x, target, alpha, *, gamma=0.0, size_average=False):
    logsm = jax.nn.log_softmax(x.astype(jnp.float32), axis=0)
    logpt = logsm[target, jnp.arange(x.shape[1])]
    pt = jnp.exp(logpt)
    a = (jnp.ones(x.shape[0], jnp.float32) if alpha is None
         else jnp.asarray(alpha, jnp.float32))
    logpt = logpt * a[target]
    loss = -1.0 * (1.0 - pt) ** gamma * logpt
    return loss.mean() if size_average else loss.sum()


if __name__ == "__main__":
    key = jax.random.PRNGKey(0)

    # Case 1: small [C, N], integer gamma fast path, sum reduction, alpha given.
    C, N = 8, 256
    kx, kt, key = jax.random.split(key, 3)
    x = jax.random.normal(kx, (C, N), dtype=jnp.float32)
    target = jax.random.randint(kt, (N,), 0, C, dtype=jnp.int32)
    alpha = jnp.linspace(0.25, 1.0, C, dtype=jnp.float32)

    loss = jax.block_until_ready(focal_loss(x, target, alpha, gamma=2.0))
    ref = _focal_loss_ref(x, target, alpha, gamma=2.0)
    assert jnp.allclose(loss, ref, rtol=1e-5, atol=1e-5), (loss, ref)

    # Case 2: ragged N (tail masking with NO padded copy of x), several tiles,
    # mean reduction, alpha=None, explicit small tile bound.
    C2, N2 = 8, 300
    kx2, kt2, key = jax.random.split(key, 3)
    x2 = jax.random.normal(kx2, (C2, N2), dtype=jnp.float32)
    t2 = jax.random.randint(kt2, (N2,), 0, C2, dtype=jnp.int32)

    loss2 = jax.block_until_ready(
        focal_loss(x2, t2, None, gamma=0.0, size_average=True, tn=128))
    ref2 = _focal_loss_ref(x2, t2, None, gamma=0.0, size_average=True)
    assert jnp.allclose(loss2, ref2, rtol=1e-5, atol=1e-5), (loss2, ref2)

    # Case 3: larger ragged N — exercises byte-sized tiles, the in-kernel chunk
    # loop with 128-aligned dynamic lane slices, and fractional gamma (clamp).
    C3, N3 = 16, 20_000
    kx3, kt3, key = jax.random.split(key, 3)
    x3 = jax.random.normal(kx3, (C3, N3), dtype=jnp.float32)
    t3 = jax.random.randint(kt3, (N3,), 0, C3, dtype=jnp.int32)
    alpha3 = jnp.linspace(0.5, 1.5, C3, dtype=jnp.float32)

    loss3 = jax.block_until_ready(
        focal_loss(x3, t3, alpha3, gamma=2.5, size_average=True))
    ref3 = _focal_loss_ref(x3, t3, alpha3, gamma=2.5, size_average=True)
    assert jnp.allclose(loss3, ref3, rtol=1e-4, atol=1e-4), (loss3, ref3)

    print("KERNEL_OK")
</pallas_src>

<mosaic_0001>
module attributes {stable_mosaic.version = 11 : i64} {
  func.func @_focal_loss_kernel(%arg0: i32, %arg1: memref<8x128xf32, #tpu.memory_space<vmem>>, %arg2: memref<1x128xi32, #tpu.memory_space<vmem>>, %arg3: memref<8x1xf32, #tpu.memory_space<vmem>>, %arg4: memref<1x128xf32, #tpu.memory_space<vmem>>) attributes {dimension_semantics = [#tpu.dimension_semantics<parallel>], iteration_bounds = array<i64: 2>, scalar_prefetch = 0 : i64, scratch_operands = 0 : i64, tpu.core_type = #tpu.core_type<tc>, window_params = [{transform_indices = @transform_0, window_bounds = array<i64: 8, 128>}, {transform_indices = @transform_1, window_bounds = array<i64: 1, 128>}, {pipeline_mode = #tpu.pipeline_mode<synchronous>, transform_indices = @transform_2, window_bounds = array<i64: 8, 1>}, {transform_indices = @transform_3, window_bounds = array<i64: 1, 128>}]} {
    %c0 = arith.constant 0 : index
    %c0_0 = arith.constant 0 : index
    %0 = vector.load %arg3[%c0, %c0_0] : memref<8x1xf32, #tpu.memory_space<vmem>>, vector<8x1xf32>
    %cst = arith.constant 0.000000e+00 : f32
    %1 = vector.broadcast %cst : f32 to vector<1x128xf32>
    %c0_i32 = arith.constant 0 : i32
    %c128_i32 = arith.constant 128 : i32
    %2 = arith.muli %c0_i32, %c128_i32 : i32
    %3 = tpu.assume_multiple %2, 128 : i32
    %c0_1 = arith.constant 0 : index
    %4 = arith.index_cast %3 : i32 to index
    %5 = vector.load %arg1[%c0_1, %4] : memref<8x128xf32, #tpu.memory_space<vmem>>, vector<8x128xf32>
    %c0_2 = arith.constant 0 : index
    %6 = arith.index_cast %3 : i32 to index
    %7 = vector.load %arg2[%c0_2, %6] : memref<1x128xi32, #tpu.memory_space<vmem>>, vector<1x128xi32>
    %cst_3 = arith.constant dense<0xFF800000> : vector<128xf32>
    %8 = vector.multi_reduction <maximumf>, %5, %cst_3 [0] : vector<8x128xf32> to vector<128xf32>
    %9 = vector.shape_cast %8 : vector<128xf32> to vector<1x128xf32>
    %10 = vector.broadcast %9 : vector<1x128xf32> to vector<8x128xf32>
    %11 = arith.subf %5, %10 : vector<8x128xf32>
    %12 = math.exp %11 : vector<8x128xf32>
    %cst_4 = arith.constant dense<0.000000e+00> : vector<128xf32>
    %13 = vector.multi_reduction <add>, %12, %cst_4 [0] : vector<8x128xf32> to vector<128xf32>
    %14 = vector.shape_cast %13 : vector<128xf32> to vector<1x128xf32>
    %15 = math.log %14 : vector<1x128xf32>
    %16 = tpu.iota {dimensions = array<i32: 0>} : vector<8x128xi32>
    %17 = vector.broadcast %7 : vector<1x128xi32> to vector<8x128xi32>
    %18 = arith.cmpi eq, %16, %17 : vector<8x128xi32>
    %cst_5 = arith.constant 0.000000e+00 : f32
    %19 = vector.broadcast %cst_5 : f32 to vector<8x128xf32>
    %20 = arith.select %18, %11, %19 : vector<8x128xi1>, vector<8x128xf32>
    %cst_6 = arith.constant dense<0.000000e+00> : vector<128xf32>
    %21 = vector.multi_reduction <add>, %20, %cst_6 [0] : vector<8x128xf32> to vector<128xf32>
    %22 = vector.shape_cast %21 : vector<128xf32> to vector<1x128xf32>
    %cst_7 = arith.constant 0.000000e+00 : f32
    %23 = vector.shape_cast %0 : vector<8x1xf32> to vector<8x1xf32>
    %24 = vector.broadcast %23 : vector<8x1xf32> to vector<8x128xf32>
    %25 = vector.broadcast %cst_7 : f32 to vector<8x128xf32>
    %26 = arith.select %18, %24, %25 : vector<8x128xi1>, vector<8x128xf32>
    %cst_8 = arith.constant dense<0.000000e+00> : vector<128xf32>
    %27 = vector.multi_reduction <add>, %26, %cst_8 [0] : vector<8x128xf32> to vector<128xf32>
    %28 = vector.shape_cast %27 : vector<128xf32> to vector<1x128xf32>
    %29 = arith.subf %22, %15 : vector<1x128xf32>
    %30 = math.exp %29 : vector<1x128xf32>
    %31 = arith.mulf %29, %28 : vector<1x128xf32>
    %cst_9 = arith.constant 1.000000e+00 : f32
    %32 = vector.broadcast %cst_9 : f32 to vector<1x128xf32>
    %33 = arith.subf %32, %30 : vector<1x128xf32>
    %cst_10 = arith.constant 0.000000e+00 : f32
    %34 = vector.broadcast %cst_10 : f32 to vector<1x128xf32>
    %35 = arith.maximumf %33, %34 : vector<1x128xf32>
    %36 = arith.mulf %35, %35 : vector<1x128xf32>
    %cst_11 = arith.constant 0.000000e+00 : f32
    %37 = vector.broadcast %cst_11 : f32 to vector<1x128xf32>
    %38 = arith.subf %37, %36 : vector<1x128xf32>
    %39 = arith.mulf %38, %31 : vector<1x128xf32>
    %40 = arith.addf %1, %39 : vector<1x128xf32>
    %c1_i32 = arith.constant 1 : i32
    %c0_12 = arith.constant 0 : index
    %c0_13 = arith.constant 0 : index
    %41 = vector.load %arg4[%c0_12, %c0_13] : memref<1x128xf32, #tpu.memory_space<vmem>>, vector<1x128xf32>
    tpu.vector_store %arg4[%c0_12, %c0_13], %40 {strides = array<i32>} : memref<1x128xf32, #tpu.memory_space<vmem>>, vector<1x128xf32>,
    return
  }
  func.func @transform_0(%arg0: i32) -> (i32, i32) {
    %c0_i32 = arith.constant 0 : i32
    %c0_i32_0 = arith.constant 0 : i32
    return %c0_i32, %arg0 : i32, i32
  }
  func.func @transform_1(%arg0: i32) -> (i32, i32) {
    %c0_i32 = arith.constant 0 : i32
    %c0_i32_0 = arith.constant 0 : i32
    return %c0_i32, %arg0 : i32, i32
  }
  func.func @transform_2(%arg0: i32) -> (i32, i32) {
    %c0_i32 = arith.constant 0 : i32
    %c0_i32_0 = arith.constant 0 : i32
    %c0_i32_1 = arith.constant 0 : i32
    return %c0_i32, %c0_i32_0 : i32, i32
  }
  func.func @transform_3(%arg0: i32) -> (i32, i32) {
    %c0_i32 = arith.constant 0 : i32
    %c0_i32_0 = arith.constant 0 : i32
    return %c0_i32, %arg0 : i32, i32
  }
}

</mosaic_0001>

<llo_original>
// kernel: tpu_custom_call.1
$region0: #{tpu_custom_call.1}
  #allocation0 [shape = 'u32[]', space=smem, size = 0x4, offset = 0x4, fixed_abs, tag = 'smem constant byte address 0x4 - core index']
  #allocation1 [shape = 'u32[144,128]{1,0:T(1,128)}', space=vmem, size = 0x12000, scoped, tag = 'internal scratch']
  %s0 = inlined_call_operand.hbm [shape: f32[8,256], index: 0, kind: input, shape index: {}]
  %s1 = inlined_call_operand.vmem [shape: s32[1,256], index: 1, kind: input, shape index: {}]
  %s2 = inlined_call_operand.vmem [shape: f32[8,1], index: 2, kind: input, shape index: {}]
  %s3 = inlined_call_operand.hbm [shape: f32[1,256], index: 3, kind: output, shape index: {}]
  %s4 = sld [smem:[#allocation0]]
  $region49: #{tpu_custom_call.1} parent=0
    _
  %s6 = ssub.s32 1, %s4
  %s7 = scalar_select 0, %s6, %s4
  $region1: #{tpu_custom_call.1} parent=0
    #allocation2 [shape = 'u8[8192]{0}', space=vmem, size = 0x2000, scoped, tag = 'input window, operand 0']
    #allocation3 [shape = 's32[2]{0}', space=sflag, size = 0x8, scoped, tag = 'scoped memory for tpu_custom_call.1']
    #allocation4 [shape = 's32[2]{0}', space=sflag, size = 0x8, scoped, tag = 'scoped memory for tpu_custom_call.1']
    #allocation5 [shape = 'u8[1024]{0}', space=vmem, size = 0x400, scoped, tag = 'output window, operand 0']
    %8 = vsyncpa [#allocation3], 0
    %s9 = scalar_lea.sflag [#allocation3], 1
    %10 = vsyncpa %s9, 0
    %11 = vsyncpa [#allocation4], 0
    %s12 = scalar_lea.sflag [#allocation4], 1
    %13 = vsyncpa %s12, 0
    loop: start=0, step=1, limit=4
    $region2: #{tpu_custom_call.1} parent=1 // loop_pre_header
      _
    $region3: #{tpu_custom_call.1} parent=1 // loop_header
      %s15 = sphi 0, %s19
      %p16 = scmp.ge.s32.totalorder %s15, 4
      %s25 = sphi 0, %s27
      %s28 = sphi 0, %s25
      %s29 = sphi 0, %s28
      %s45 = sphi 0, %s29
      %s51 = sphi 0, %s53
      %s54 = sphi 0, %s51
      %s55 = sphi 0, %s54
      %s71 = sphi 0, %s55
      %s75 = sphi 0, %s75
      %s77 = sphi 0, %s75
      %s78 = sphi 0, %s77
      %s92 = sphi 0, %s78
      %s98 = sphi 0, %s100
      %s101 = sphi 0, %s98
      %s102 = sphi 0, %s101
      %s118 = sphi 0, %s102
    $region4: #{tpu_custom_call.1} parent=1 // loop_header_branch
      %18 = sbr.rel (%p16) target = $region8
    $region5: #{tpu_custom_call.1} parent=1 // loop_body
      %s20 = ssub.s32 %s15, 1
      %s21 = ssub.s32 %s15, 2
      %s22 = sadd.s32 %s15, 1
      %s23 = ssub.s32 %s15, %s22
      %p24 = scmp.eq.s32.totalorder %s23, 0
      %s26 = sadd.s32 %s25, 1
      %s27 = scalar_select %p24, %s25, %s26
      %p30 = pneg %p24
      %p31 = scmp.eq.s32.totalorder %s15, 1
      %p32 = por %p30, %p31
      %p33 = scmp.ne.s32.totalorder %s25, %s28
      %p34 = scmp.eq.s32.totalorder %s15, 0
      %p35 = por %p33, %p34
      %p36 = scmp.ne.s32.totalorder %s25, %s28
      %p37 = scmp.eq.s32.totalorder %s20, 1
      %p38 = por %p36, %p37
      %p39 = scmp.ne.s32.totalorder %s28, %s29
      %p40 = scmp.eq.s32.totalorder %s20, 0
      %p41 = por %p39, %p40
      %p42 = scmp.ne.s32.totalorder %s28, %s29
      %p43 = scmp.eq.s32.totalorder %s21, 1
      %p44 = por %p42, %p43
      %p46 = scmp.ne.s32.totalorder %s29, %s45
      %p47 = scmp.eq.s32.totalorder %s21, 0
      %p48 = por %p46, %p47
      %s49 = ssub.s32 %s15, %s22
      %p50 = scmp.eq.s32.totalorder %s49, 0
      %s52 = sadd.s32 %s51, 1
      %s53 = scalar_select %p50, %s51, %s52
      %p56 = pneg %p50
      %p57 = scmp.eq.s32.totalorder %s15, 1
      %p58 = por %p56, %p57
      %p59 = scmp.ne.s32.totalorder %s51, %s54
      %p60 = scmp.eq.s32.totalorder %s15, 0
      %p61 = por %p59, %p60
      %p62 = scmp.ne.s32.totalorder %s51, %s54
      %p63 = scmp.eq.s32.totalorder %s20, 1
      %p64 = por %p62, %p63
      %p65 = scmp.ne.s32.totalorder %s54, %s55
      %p66 = scmp.eq.s32.totalorder %s20, 0
      %p67 = por %p65, %p66
      %p68 = scmp.ne.s32.totalorder %s54, %s55
      %p69 = scmp.eq.s32.totalorder %s21, 1
      %p70 = por %p68, %p69
      %p72 = scmp.ne.s32.totalorder %s55, %s71
      %p73 = scmp.eq.s32.totalorder %s21, 0
      %p74 = por %p72, %p73
      %s76 = sadd.s32 %s75, 1
      %p79 = scmp.eq.s32.totalorder %s15, 1
      %p80 = scmp.ne.s32.totalorder %s75, %s77
      %p81 = scmp.eq.s32.totalorder %s15, 0
      %p82 = por %p80, %p81
      %p83 = scmp.ne.s32.totalorder %s75, %s77
      %p84 = scmp.eq.s32.totalorder %s20, 1
      %p85 = por %p83, %p84
      %p86 = scmp.ne.s32.totalorder %s77, %s78
      %p87 = scmp.eq.s32.totalorder %s20, 0
      %p88 = por %p86, %p87
      %p89 = scmp.ne.s32.totalorder %s77, %s78
      %p90 = scmp.eq.s32.totalorder %s21, 1
      %p91 = por %p89, %p90
      %p93 = scmp.ne.s32.totalorder %s78, %s92
      %p94 = scmp.eq.s32.totalorder %s21, 0
      %p95 = por %p93, %p94
      %s96 = ssub.s32 %s15, %s22
      %p97 = scmp.eq.s32.totalorder %s96, 0
      %s99 = sadd.s32 %s98, 1
      %s100 = scalar_select %p97, %s98, %s99
      %p103 = pneg %p97
      %p104 = scmp.eq.s32.totalorder %s15, 1
      %p105 = por %p103, %p104
      %p106 = scmp.ne.s32.totalorder %s98, %s101
      %p107 = scmp.eq.s32.totalorder %s15, 0
      %p108 = por %p106, %p107
      %p109 = scmp.ne.s32.totalorder %s98, %s101
      %p110 = scmp.eq.s32.totalorder %s20, 1
      %p111 = por %p109, %p110
      %p112 = scmp.ne.s32.totalorder %s101, %s102
      %p113 = scmp.eq.s32.totalorder %s20, 0
      %p114 = por %p112, %p113
      %p115 = scmp.ne.s32.totalorder %s101, %s102
      %p116 = scmp.eq.s32.totalorder %s21, 1
      %p117 = por %p115, %p116
      %p119 = scmp.ne.s32.totalorder %s102, %s118
      %p120 = scmp.eq.s32.totalorder %s21, 0
      %p121 = por %p119, %p120
      %p122 = scmp.le.s32.totalorder 1, %s15
      %p123 = scmp.lt.s32.totalorder %s15, 3
      %p124 = pnand %p122, %p123
      %p125 = pneg %p124
      // Predicated region
      $region9: #{tpu_custom_call.1} parent=5 // pred_check
        _
      $region10: #{tpu_custom_call.1} parent=5 // pred_check_branch
        %127 = sbr.rel (%p124) target = $region12
      $region11: #{tpu_custom_call.1} parent=5 // pred_region
        %s128 = ssub.s32 %s15, 1
        // Predicated region
        $region13: #{tpu_custom_call.1} parent=11 // pred_check
          %p129 = pneg %p88
        $region14: #{tpu_custom_call.1} parent=11 // pred_check_branch
          %131 = sbr.rel (%p129) target = $region16
        $region15: #{tpu_custom_call.1} parent=11 // pred_region
          _
        $region16: #{tpu_custom_call.1} parent=11 // pred_fallthru
          _
      $region12: #{tpu_custom_call.1} parent=5 // pred_fallthru
        _
      %p132 = scmp.lt.s32.totalorder %s15, 2
      // Predicated region
      $region17: #{tpu_custom_call.1} parent=5 // pred_check
        %p133 = pneg %p132
      $region18: #{tpu_custom_call.1} parent=5 // pred_check_branch
        %135 = sbr.rel (%p133) target = $region20
      $region19: #{tpu_custom_call.1} parent=5 // pred_region
        // Predicated region
        $region21: #{tpu_custom_call.1} parent=19 // pred_check
          %p136 = pneg %p35
        $region22: #{tpu_custom_call.1} parent=19 // pred_check_branch
          %138 = sbr.rel (%p136) target = $region24
        $region23: #{tpu_custom_call.1} parent=19 // pred_region
          %s139 = sand.u32 %s25, 1
          %s140 = scalar_lea.sflag [#allocation3], %s139
          %s141 = sand.u32 %s25, 1
          %s142 = smul.addr %s141, 8
          %s143 = scalar_lea.vmem [#allocation2], %s142
          %s145 = ssub.s32 128, 128
          %146 = vsyncadd %s140, %s145
          %s147 = smul.addr %s15, 128
          %s148 = scalar_lea.hbm %s0, %s147
          %s150 = sshll.u32 %s143, 4
          %s151 = int_to_ptr.vmem [resolvable:$true] %s150
          %153 = dma.hbm_to_vmem [thread:$0]  %s148, 128, %s151, %s140
        $region24: #{tpu_custom_call.1} parent=19 // pred_fallthru
          _
        // Predicated region
        $region25: #{tpu_custom_call.1} parent=19 // pred_check
          %p154 = pneg %p61
        $region26: #{tpu_custom_call.1} parent=19 // pred_check_branch
          %156 = sbr.rel (%p154) target = $region28
        $region27: #{tpu_custom_call.1} parent=19 // pred_region
          %p157 = scmp.lt.s32.totalorder %s15, 1
          %s158 = scalar_select %p157, %s15, 1
          %s159 = scalar_lea.vmem %s1, %s158
        $region28: #{tpu_custom_call.1} parent=19 // pred_fallthru
          _
      $region20: #{tpu_custom_call.1} parent=5 // pred_fallthru
        _
      %p160 = scmp.le.s32.totalorder 1, %s15
      %p161 = scmp.lt.s32.totalorder %s15, 3
      %p162 = pnand %p160, %p161
      %p163 = pneg %p162
      // Predicated region
      $region29: #{tpu_custom_call.1} parent=5 // pred_check
        _
      $region30: #{tpu_custom_call.1} parent=5 // pred_check_branch
        %165 = sbr.rel (%p162) target = $region32
      $region31: #{tpu_custom_call.1} parent=5 // pred_region
        %s166 = ssub.s32 %s15, 1
        %s167 = sand.u32 %s28, 1
        %s168 = scalar_lea.sflag [#allocation3], %s167
        %s169 = sand.u32 %s28, 1
        %s170 = smul.addr %s169, 8
        %s171 = scalar_lea.vmem [#allocation2], %s170
        // Predicated region
        $region33: #{tpu_custom_call.1} parent=31 // pred_check
          %p172 = pneg %p41
        $region34: #{tpu_custom_call.1} parent=31 // pred_check_branch
          %174 = sbr.rel (%p172) target = $region36
        $region35: #{tpu_custom_call.1} parent=31 // pred_region
          %175 = dma.done %s168, 128
        $region36: #{tpu_custom_call.1} parent=31 // pred_fallthru
          _
        %s176 = sand.u32 %s28, 1
        %s177 = scalar_lea.sflag [#allocation3], %s176
        %s178 = sand.u32 %s28, 1
        %s179 = smul.addr %s178, 8
        %s180 = scalar_lea.vmem [#allocation2], %s179
        %p181 = pneg %p41
        %p182 = pneg %p38
        %p183 = scmp.lt.s32.totalorder %s20, 1
        %s184 = scalar_select %p183, %s20, 1
        %s185 = scalar_lea.vmem %s1, %s184
        %p186 = pneg %p67
        %p187 = pneg %p64
        %p188 = pneg %p88
        %p189 = pneg %p85
        %p190 = pneg %p114
        %p191 = pneg %p111
        %s192 = sand.u32 %s101, 1
        %s193 = scalar_lea.sflag [#allocation4], %s192
        %s194 = sand.u32 %s101, 1
        %s195 = scalar_lea.vmem [#allocation5], %s194
        %p196 = scmp.lt.s32.totalorder %s20, 1
        %s197 = scalar_select %p196, %s20, 1
        %s198 = scalar_lea.vmem %s1, %s197
        %v199 = vld [vmem:[%s2] sm:$0xff]
        %v200 = vld [vmem:[%s171] sm:$0xff]
        %v201 = vld [vmem:[%s198] sm:$0x1]
        %v202 = vrot.slane %v200, 4
        %v203 = vmax.f32 %v200, %v202
        %v204 = vrot.slane %v203, 2
        %v205 = vmax.f32 %v203, %v204
        %v206 = vrot.slane %v205, 1
        %v207 = vmax.f32 %v205, %v206
        %v208 = vsub.f32 %v200, %v207
        %v209 = vmul.f32 %v208, 1.442695
        %v210 = vpow.pop %v209
        %v211 = vrot.slane %v210, 4
        %v212 = vadd.f32 %v210, %v211
        %v213 = vrot.slane %v212, 2
        %v214 = vadd.f32 %v212, %v213
        %v215 = vrot.slane %v214, 1
        %v216 = vadd.f32 %v214, %v215
        %v217 = vlog2.pop %v216
        %v218 = vmul.f32 %v217, 0.6931472
        %v219 = vlaneseq
        %v220 = vshrl.u32 %v219, 7
        %v221 = vlaneseq
        %v222 = vshrl.u32 %v221, 7
        %v223 = vsub.s32 0, %v222
        %v224 = vrot.slane %v201, %v223
        %vm225 = vcmp.eq.s32.totalorder %v220, %v224
        %v226 = vsel %vm225, %v208, 0.0
        %v227 = vrot.slane %v226, 4
        %v228 = vadd.f32 %v226, %v227
        %v229 = vrot.slane %v228, 2
        %v230 = vadd.f32 %v228, %v229
        %v231 = vrot.slane %v230, 1
        %v232 = vadd.f32 %v230, %v231
        %234 = vset.pattern.permute.xlu0 0
        %235 = vperm.xlu0 %234, %v199
        %v236 = vpop.permute.xlu0 %235
        %v238 = vsel %vm225, %v236, 0.0
        %v239 = vrot.slane %v238, 4
        %v240 = vadd.f32 %v238, %v239
        %v241 = vrot.slane %v240, 2
        %v242 = vadd.f32 %v240, %v241
        %v243 = vrot.slane %v242, 1
        %v244 = vadd.f32 %v242, %v243
        %v245 = vsub.f32 %v232, %v218
        %v246 = vmul.f32 %v245, 1.442695
        %v247 = vpow.pop %v246
        %v248 = vmul.f32 %v245, %v244
        %v249 = vsub.f32 1.0, %v247
        %v250 = vmax.f32 %v249, 0.0
        %v251 = vmul.f32 %v250, %v250
        %v252 = vsub.f32 0.0, %v251
        %v253 = vmul.f32 %v252, %v248
        %v254 = vadd.f32 %v253, 0.0
        %255 = vst [vmem:[%s195] sm:$0x1] %v254
        %s256 = sand.u32 %s101, 1
        %s257 = scalar_lea.sflag [#allocation4], %s256
        %s258 = sand.u32 %s101, 1
        %s259 = scalar_lea.vmem [#allocation5], %s258
        // Predicated region
        $region37: #{tpu_custom_call.1} parent=31 // pred_check
          %p260 = pneg %p111
        $region38: #{tpu_custom_call.1} parent=31 // pred_check_branch
          %262 = sbr.rel (%p260) target = $region40
        $region39: #{tpu_custom_call.1} parent=31 // pred_region
          %s264 = ssub.s32 16, 16
          %265 = vsyncadd %s257, %s264
          %s266 = smul.addr %s20, 16
          %s267 = scalar_lea.hbm %s3, %s266
          %s269 = sshll.u32 %s259, 4
          %s270 = int_to_ptr.vmem [resolvable:$true] %s269
          %272 = dma.vmem_to_hbm [thread:$0]  %s270, 16, %s267, %s257
        $region40: #{tpu_custom_call.1} parent=31 // pred_fallthru
          _
      $region32: #{tpu_custom_call.1} parent=5 // pred_fallthru
        _
      %p273 = scmp.le.s32.totalorder 2, %s15
      // Predicated region
      $region41: #{tpu_custom_call.1} parent=5 // pred_check
        %p274 = pneg %p273
      $region42: #{tpu_custom_call.1} parent=5 // pred_check_branch
        %276 = sbr.rel (%p274) target = $region44
      $region43: #{tpu_custom_call.1} parent=5 // pred_region
        %s277 = ssub.s32 %s15, 2
        // Predicated region
        $region45: #{tpu_custom_call.1} parent=43 // pred_check
          %p278 = pneg %p117
        $region46: #{tpu_custom_call.1} parent=43 // pred_check_branch
          %280 = sbr.rel (%p278) target = $region48
        $region47: #{tpu_custom_call.1} parent=43 // pred_region
          %s281 = sand.u32 %s102, 1
          %s282 = scalar_lea.sflag [#allocation4], %s281
          %s283 = sand.u32 %s102, 1
          %s284 = scalar_lea.vmem [#allocation5], %s283
          %285 = dma.done %s282, 16
        $region48: #{tpu_custom_call.1} parent=43 // pred_fallthru
          _
      $region44: #{tpu_custom_call.1} parent=5 // pred_fallthru
        _
    $region6: #{tpu_custom_call.1} parent=1 // loop_footer
      %s19 = sadd.s32 1, %s15
    $region7: #{tpu_custom_call.1} parent=1 // loop_footer_branch
      %14 = sbr.rel target = $region3
    $region8: #{tpu_custom_call.1} parent=1 // loop_exit
      _
    %286 = vsyncpa [#allocation3], 1
    %s287 = scalar_lea.sflag [#allocation3], 1
    %288 = vsyncpa %s287, 1
    %289 = vsyncpa [#allocation4], 1
    %s290 = scalar_lea.sflag [#allocation4], 1
    %291 = vsyncpa %s290, 1

</llo_original>
